<compile_context>
chip_gen: v5e
topology: v5e:2x2
jax: 0.10.0
libtpu: 0.0.40
codegen_flags: <defaults>
</compile_context>

<pallas_src>
import jax
import jax.numpy as jnp
from jax.experimental import pallas as pl
from jax.experimental.pallas import tpu as pltpu


def _round_up(v, m):
    return ((v + m - 1) // m) * m


def _fit(dim, tile, align):
    """Pick a legal tile and padded extent for one axis.

    If the whole axis fits in one block we use a full-extent block (always legal,
    no padding, no trailing slice). Otherwise the tile is aligned down to `align`
    and the axis is zero-padded up to a multiple of the tile.
    """
    if dim <= tile:
        return dim, dim
    tile = max(align, (tile // align) * align)
    return tile, _round_up(dim, tile)


def _maybe_pad(a, pads):
    if any(p for _, p in pads):
        return jnp.pad(a, pads)
    return a


def linear_sub_kernel(x_ref, w_ref, b_ref, other_ref, o_ref):
    """o = x @ w.T + b - other, tiled over (M, N, K) with K as the last grid axis.

    The f32 output block is resident across the K axis and doubles as the
    accumulator (no VMEM scratch). w_ref is a (tn, tk) tile in torch layout;
    contracting dim 1 of both operands avoids any materialized transpose.
    """
    k = pl.program_id(2)

    @pl.when(k == 0)
    def _():
        o_ref[...] = jnp.zeros_like(o_ref)

    o_ref[...] += jax.lax.dot_general(
        x_ref[...], w_ref[...],
        dimension_numbers=(((1,), (1,)), ((), ())),
        preferred_element_type=jnp.float32,
    )

    @pl.when(k == pl.num_programs(2) - 1)
    def _():
        o_ref[...] = o_ref[...] + b_ref[...] - other_ref[...]


def linear_sub(x, w, b, other, *, tm=512, tn=512, tk=512, force_pallas=False):
    """y = x @ w.T + b - other   (torch.nn.Linear followed by a subtraction).

    x: (M, K), w: (N, K) (torch layout), b: (N,), other: (M, N); all fp32.
    """
    M, K = x.shape
    N = w.shape[0]

    # Small-problem fast path: for tiny shapes (like the module's 1x16 @ 16x32)
    # the pallas_call is pure launch/pipeline overhead -- let XLA handle it.
    if not force_pallas and (M * N * K) < (1 << 20):
        return x @ w.T + b - other

    tm, Mp = _fit(M, tm, 8)     # sublane axis of x / other / out
    tn, Np = _fit(N, tn, 128)   # lane axis of w / other / out
    tk, Kp = _fit(K, tk, 128)   # lane axis of x, sublane axis of w tile

    # Zero-pad only the axes that actually need it (zero K-padding contributes
    # nothing to the dot; padded M/N rows/cols are sliced off at the end).
    xp = _maybe_pad(x, ((0, Mp - M), (0, Kp - K)))
    wp = _maybe_pad(w, ((0, Np - N), (0, Kp - K)))          # stays in (N, K) layout
    bp = _maybe_pad(b.reshape(1, N), ((0, 0), (0, Np - N)))
    op = _maybe_pad(other, ((0, Mp - M), (0, Np - N)))

    grid = (Mp // tm, Np // tn, Kp // tk)

    # Scoped-VMEM budget derived from the tiles (2x-buffered inputs + resident
    # output), capped at 48 MiB so it is safe on v7x (64 MiB/TC) while still
    # giving v5e/v6e (128 MiB) room for larger user-requested tiles.
    est_bytes = (2 * (tm * tk + tn * tk + tn) + 3 * tm * tn) * 4
    vmem_limit = int(min(max(2 * est_bytes, 32 * 1024 * 1024), 48 * 1024 * 1024))

    out = pl.pallas_call(
        linear_sub_kernel,
        out_shape=jax.ShapeDtypeStruct((Mp, Np), jnp.float32),
        grid=grid,
        in_specs=[
            pl.BlockSpec((tm, tk), lambda i, j, k: (i, k)),   # x tile
            pl.BlockSpec((tn, tk), lambda i, j, k: (j, k)),   # w tile (torch layout)
            pl.BlockSpec((1, tn), lambda i, j, k: (0, j)),    # bias tile
            pl.BlockSpec((tm, tn), lambda i, j, k: (i, j)),   # other tile
        ],
        out_specs=pl.BlockSpec((tm, tn), lambda i, j, k: (i, j)),
        compiler_params=pltpu.CompilerParams(
            dimension_semantics=("parallel", "parallel", "arbitrary"),
            vmem_limit_bytes=vmem_limit,
        ),
    )(xp, wp, bp, op)

    if Mp != M or Np != N:
        out = out[:M, :N]
    return out.astype(x.dtype)


if __name__ == "__main__":
    # Shapes consistent with the PyTorch module: x1 = torch.randn(1, 16),
    # Linear(16 -> 32), other broadcast-compatible with the linear output.
    in_features = 16
    out_features = 32
    batch = 1

    key = jax.random.PRNGKey(0)
    kx, ko, kw, kb = jax.random.split(key, 4)

    x1 = jax.random.normal(kx, (batch, in_features), dtype=jnp.float32)
    other = jax.random.normal(ko, (batch, out_features), dtype=jnp.float32)

    # Deterministic linear parameters (torch.nn.Linear-style shapes/init).
    bound = 1.0 / float(in_features) ** 0.5
    weight = jax.random.uniform(kw, (out_features, in_features),
                                minval=-bound, maxval=bound, dtype=jnp.float32)
    bias = jax.random.uniform(kb, (out_features,),
                              minval=-bound, maxval=bound, dtype=jnp.float32)

    ref = x1 @ weight.T + bias - other

    # 1) Module-sized shapes through the actual Pallas kernel (single-block
    #    full-extent tiles, grid (1,1,1)).
    out_k = linear_sub(x1, weight, bias, other, force_pallas=True)
    jax.block_until_ready(out_k)
    assert out_k.shape == ref.shape
    assert jnp.allclose(out_k, ref, atol=1e-5, rtol=1e-5)

    # 2) Module-sized shapes through the default path (small-problem XLA fast path).
    out_f = linear_sub(x1, weight, bias, other)
    jax.block_until_ready(out_f)
    assert jnp.allclose(out_f, ref, atol=1e-5, rtol=1e-5)

    # 3) Larger, K-unaligned shapes with small tiles so the grid has multiple
    #    M/N/K steps: exercises the in-place accumulator, the pl.when epilogue,
    #    and K-only zero padding (M and N divide their tiles, so no pad/slice).
    key2 = jax.random.PRNGKey(1)
    ka, kb2, kc, kd = jax.random.split(key2, 4)
    M2, K2, N2 = 16, 640, 384
    x2 = jax.random.normal(ka, (M2, K2), dtype=jnp.float32)
    w2 = jax.random.normal(kb2, (N2, K2), dtype=jnp.float32) * 0.05
    b2 = jax.random.normal(kc, (N2,), dtype=jnp.float32)
    o2 = jax.random.normal(kd, (M2, N2), dtype=jnp.float32)

    out2 = linear_sub(x2, w2, b2, o2, tm=8, tn=128, tk=256)
    jax.block_until_ready(out2)
    ref2 = (jnp.dot(x2, w2.T, precision=jax.lax.Precision.HIGHEST) + b2 - o2)
    assert jnp.allclose(out2, ref2, atol=1e-3, rtol=1e-3)

    print("KERNEL_OK")
</pallas_src>

<mosaic_0001>
module attributes {stable_mosaic.version = 11 : i64} {
  func.func @linear_sub_kernel(%arg0: i32, %arg1: i32, %arg2: i32, %arg3: memref<1x16xf32, #tpu.memory_space<vmem>>, %arg4: memref<32x16xf32, #tpu.memory_space<vmem>>, %arg5: memref<1x32xf32, #tpu.memory_space<vmem>>, %arg6: memref<1x32xf32, #tpu.memory_space<vmem>>, %arg7: memref<1x32xf32, #tpu.memory_space<vmem>>) attributes {dimension_semantics = [#tpu.dimension_semantics<parallel>, #tpu.dimension_semantics<parallel>, #tpu.dimension_semantics<arbitrary>], iteration_bounds = array<i64: 1, 1, 1>, scalar_prefetch = 0 : i64, scratch_operands = 0 : i64, tpu.core_type = #tpu.core_type<tc>, window_params = [{transform_indices = @transform_0, window_bounds = array<i64: 1, 16>}, {transform_indices = @transform_1, window_bounds = array<i64: 32, 16>}, {transform_indices = @transform_2, window_bounds = array<i64: 1, 32>}, {transform_indices = @transform_3, window_bounds = array<i64: 1, 32>}, {transform_indices = @transform_4, window_bounds = array<i64: 1, 32>}]} {
    %c0_i32 = arith.constant 0 : i32
    %0 = arith.cmpi eq, %arg2, %c0_i32 : i32
    %1 = arith.extui %0 : i1 to i32
    %c0_i32_0 = arith.constant 0 : i32
    %2 = arith.cmpi ne, %1, %c0_i32_0 : i32
    scf.if %2 {
      %cst_10 = arith.constant 0.000000e+00 : f32
      %12 = vector.broadcast %cst_10 : f32 to vector<1x32xf32>
      %c0_11 = arith.constant 0 : index
      %c0_12 = arith.constant 0 : index
      %13 = vector.load %arg7[%c0_11, %c0_12] : memref<1x32xf32, #tpu.memory_space<vmem>>, vector<1x32xf32>
      tpu.vector_store %arg7[%c0_11, %c0_12], %12 {strides = array<i32>} : memref<1x32xf32, #tpu.memory_space<vmem>>, vector<1x32xf32>,
    } else {
    }
    %c0 = arith.constant 0 : index
    %c0_1 = arith.constant 0 : index
    %3 = vector.load %arg7[%c0, %c0_1] : memref<1x32xf32, #tpu.memory_space<vmem>>, vector<1x32xf32>
    %c0_2 = arith.constant 0 : index
    %c0_3 = arith.constant 0 : index
    %4 = vector.load %arg3[%c0_2, %c0_3] : memref<1x16xf32, #tpu.memory_space<vmem>>, vector<1x16xf32>
    %c0_4 = arith.constant 0 : index
    %c0_5 = arith.constant 0 : index
    %5 = vector.load %arg4[%c0_4, %c0_5] : memref<32x16xf32, #tpu.memory_space<vmem>>, vector<32x16xf32>
    %cst = arith.constant dense<0.000000e+00> : vector<1x32xf32>
    %6 = tpu.matmul %4, %5, %cst {dimension_numbers = #tpu.dot_dimension_numbers<[1], [1], [0], [0], [0, 0, 1, 0], [], []>} : vector<1x16xf32>, vector<32x16xf32>, vector<1x32xf32> -> vector<1x32xf32>
    %7 = arith.addf %3, %6 : vector<1x32xf32>
    %c0_6 = arith.constant 0 : index
    %c0_7 = arith.constant 0 : index
    %8 = vector.load %arg7[%c0_6, %c0_7] : memref<1x32xf32, #tpu.memory_space<vmem>>, vector<1x32xf32>
    tpu.vector_store %arg7[%c0_6, %c0_7], %7 {strides = array<i32>} : memref<1x32xf32, #tpu.memory_space<vmem>>, vector<1x32xf32>,
    %c0_i32_8 = arith.constant 0 : i32
    %9 = arith.cmpi eq, %arg2, %c0_i32_8 : i32
    %10 = arith.extui %9 : i1 to i32
    %c0_i32_9 = arith.constant 0 : i32
    %11 = arith.cmpi ne, %10, %c0_i32_9 : i32
    scf.if %11 {
      %c0_10 = arith.constant 0 : index
      %c0_11 = arith.constant 0 : index
      %12 = vector.load %arg7[%c0_10, %c0_11] : memref<1x32xf32, #tpu.memory_space<vmem>>, vector<1x32xf32>
      %c0_12 = arith.constant 0 : index
      %c0_13 = arith.constant 0 : index
      %13 = vector.load %arg5[%c0_12, %c0_13] : memref<1x32xf32, #tpu.memory_space<vmem>>, vector<1x32xf32>
      %14 = arith.addf %12, %13 : vector<1x32xf32>
      %c0_14 = arith.constant 0 : index
      %c0_15 = arith.constant 0 : index
      %15 = vector.load %arg6[%c0_14, %c0_15] : memref<1x32xf32, #tpu.memory_space<vmem>>, vector<1x32xf32>
      %16 = arith.subf %14, %15 : vector<1x32xf32>
      %c0_16 = arith.constant 0 : index
      %c0_17 = arith.constant 0 : index
      %17 = vector.load %arg7[%c0_16, %c0_17] : memref<1x32xf32, #tpu.memory_space<vmem>>, vector<1x32xf32>
      tpu.vector_store %arg7[%c0_16, %c0_17], %16 {strides = array<i32>} : memref<1x32xf32, #tpu.memory_space<vmem>>, vector<1x32xf32>,
    } else {
    }
    return
  }
  func.func @transform_0(%arg0: i32, %arg1: i32, %arg2: i32) -> (i32, i32) {
    %c0_i32 = arith.constant 0 : i32
    return %arg0, %arg2 : i32, i32
  }
  func.func @transform_1(%arg0: i32, %arg1: i32, %arg2: i32) -> (i32, i32) {
    %c0_i32 = arith.constant 0 : i32
    return %arg1, %arg2 : i32, i32
  }
  func.func @transform_2(%arg0: i32, %arg1: i32, %arg2: i32) -> (i32, i32) {
    %c0_i32 = arith.constant 0 : i32
    %c0_i32_0 = arith.constant 0 : i32
    return %c0_i32, %arg1 : i32, i32
  }
  func.func @transform_3(%arg0: i32, %arg1: i32, %arg2: i32) -> (i32, i32) {
    %c0_i32 = arith.constant 0 : i32
    return %arg0, %arg1 : i32, i32
  }
  func.func @transform_4(%arg0: i32, %arg1: i32, %arg2: i32) -> (i32, i32) {
    %c0_i32 = arith.constant 0 : i32
    return %arg0, %arg1 : i32, i32
  }
}

</mosaic_0001>

<llo_original>
// kernel: tpu_custom_call.1
$region0: #{tpu_custom_call.1}
  #allocation0 [shape = 'u32[]', space=smem, size = 0x4, offset = 0x4, fixed_abs, tag = 'smem constant byte address 0x4 - core index']
  #allocation1 [shape = 'u32[72,128]{1,0:T(1,128)}', space=vmem, size = 0x9000, scoped, tag = 'internal scratch']
  %s0 = inlined_call_operand.vmem [shape: f32[1,16], index: 0, kind: input, shape index: {}]
  %s1 = inlined_call_operand.vmem [shape: f32[32,16], index: 1, kind: input, shape index: {}]
  %s2 = inlined_call_operand.vmem [shape: f32[1,32], index: 2, kind: input, shape index: {}]
  %s3 = inlined_call_operand.vmem [shape: f32[1,32], index: 3, kind: input, shape index: {}]
  %s4 = inlined_call_operand.hbm [shape: f32[1,32], index: 4, kind: output, shape index: {}]
  %s5 = sld [smem:[#allocation0]]
  $region34: #{tpu_custom_call.1} parent=0
    _
  %s7 = ssub.s32 1, %s5
  %s8 = scalar_select 0, %s7, %s5
  $region1: #{tpu_custom_call.1} parent=0
    #allocation2 [shape = 'u8[512]{0}', space=vmem, size = 0x400, scoped, tag = 'output window, operand 0, single buffered']
    #allocation3 [shape = 's32[1]{0}', space=sflag, size = 0x4, scoped, tag = 'scoped memory for tpu_custom_call.1']
    %9 = vsyncpa [#allocation3], 0
    // Predicated region
    $region2: #{tpu_custom_call.1} parent=1 // pred_check
      _
    $region3: #{tpu_custom_call.1} parent=1 // pred_check_branch
      %11 = sbr.rel (0) target = $region5
    $region4: #{tpu_custom_call.1} parent=1 // pred_region
      _
    $region5: #{tpu_custom_call.1} parent=1 // pred_fallthru
      _
    // Predicated region
    $region6: #{tpu_custom_call.1} parent=1 // pred_check
      _
    $region7: #{tpu_custom_call.1} parent=1 // pred_check_branch
      %13 = sbr.rel (0) target = $region9
    $region8: #{tpu_custom_call.1} parent=1 // pred_region
      _
    $region9: #{tpu_custom_call.1} parent=1 // pred_fallthru
      _
    // Predicated region
    $region10: #{tpu_custom_call.1} parent=1 // pred_check
      _
    $region11: #{tpu_custom_call.1} parent=1 // pred_check_branch
      %15 = sbr.rel (0) target = $region13
    $region12: #{tpu_custom_call.1} parent=1 // pred_region
      _
    $region13: #{tpu_custom_call.1} parent=1 // pred_fallthru
      _
    // Predicated region
    $region14: #{tpu_custom_call.1} parent=1 // pred_check
      _
    $region15: #{tpu_custom_call.1} parent=1 // pred_check_branch
      %17 = sbr.rel (0) target = $region17
    $region16: #{tpu_custom_call.1} parent=1 // pred_region
      _
    $region17: #{tpu_custom_call.1} parent=1 // pred_fallthru
      _
    %p18 = scmp.eq.s32.totalorder 0, 0
    // Predicated region
    $region18: #{tpu_custom_call.1} parent=1 // pred_check
      %p19 = pneg %p18
    $region19: #{tpu_custom_call.1} parent=1 // pred_check_branch
      %21 = sbr.rel (%p19) target = $region21
    $region20: #{tpu_custom_call.1} parent=1 // pred_region
      %vm22 = vcmask 253952
      %23 = vst.msk [vmem:[#allocation2] sm:$0x1] %vm22, 0.0
    $region21: #{tpu_custom_call.1} parent=1 // pred_fallthru
      _
    %v24 = vld [vmem:[#allocation2] sm:$0x1]
    %v25 = vld [vmem:[%s0] sm:$0x1]
    %v26 = vld [vmem:[%s1] sm:$0xff]
    %v27 = vld [vmem:[%s1 + $0x8] sm:$0xff]
    %v28 = vld [vmem:[%s1 + $0x10] sm:$0xff]
    %v29 = vld [vmem:[%s1 + $0x18] sm:$0xff]
    %vm30 = vcmask 130048
    %v32 = vsel %vm30, %v25, 0
    %v35 = vsel %vm30, %v26, 0
    %v38 = vsel %vm30, %v27, 0
    %v41 = vsel %vm30, %v28, 0
    %v44 = vsel %vm30, %v29, 0
    %46 = vmatpush.xpose.msra.mxu0 0.0
    %47 = vmatpush.xpose.msra.mxu0 0.0
    %48 = vmatpush.xpose.msra.mxu0 0.0
    %49 = vmatpush.xpose.msra.mxu0 0.0
    %50 = vmatpush.xpose.msra.mxu0 0.0
    %51 = vmatpush.xpose.msra.mxu0 0.0
    %52 = vmatpush.xpose.msra.mxu0 0.0
    %53 = vmatpush.xpose.msra.mxu0 0.0
    %54 = vmatpush.xpose.msra.mxu0 0.0
    %55 = vmatpush.xpose.msra.mxu0 0.0
    %56 = vmatpush.xpose.msra.mxu0 0.0
    %57 = vmatpush.xpose.msra.mxu0 0.0
    %58 = vmatpush.xpose.msra.mxu0 %v44
    %59 = vmatpush.xpose.msra.mxu0 %v41
    %60 = vmatpush.xpose.msra.mxu0 %v38
    %61 = vmatpush.xpose.msra.mxu0 %v35
    %62 = vmatmul.f32.gmra.mxu0 %v32
    %v63 = vpop.f32.mrf.mxu0
    %v64 = vadd.f32 0.0, %v63
    %65 = vdwg.mxu0
    %v66 = vadd.f32 %v24, %v64
    %vm67 = vcmask 253952
    %68 = vst.msk [vmem:[#allocation2] sm:$0x1] %vm67, %v66
    // Predicated region
    $region22: #{tpu_custom_call.1} parent=1 // pred_check
      %p69 = pneg %p18
    $region23: #{tpu_custom_call.1} parent=1 // pred_check_branch
      %71 = sbr.rel (%p69) target = $region25
    $region24: #{tpu_custom_call.1} parent=1 // pred_region
      %v72 = vld [vmem:[#allocation2] sm:$0x1]
      %v73 = vld [vmem:[%s2] sm:$0x1]
      %v74 = vadd.f32 %v72, %v73
      %v75 = vld [vmem:[%s3] sm:$0x1]
      %v76 = vsub.f32 %v74, %v75
      %77 = vst.msk [vmem:[#allocation2] sm:$0x1] %vm67, %v76
    $region25: #{tpu_custom_call.1} parent=1 // pred_fallthru
      _
    // Predicated region
    $region26: #{tpu_custom_call.1} parent=1 // pred_check
      _
    $region27: #{tpu_custom_call.1} parent=1 // pred_check_branch
      %79 = sbr.rel (0) target = $region29
    $region28: #{tpu_custom_call.1} parent=1 // pred_region
      %81 = vsyncadd [#allocation3], 0
      %s83 = sshll.u32 [#allocation2], 4
      %s84 = int_to_ptr.vmem [resolvable:$true] %s83
      %s85 = sshll.u32 %s4, 4
      %s86 = int_to_ptr.hbm [resolvable:$true] %s85
      %88 = dma.vmem_to_hbm [thread:$0]  %s84, 16, %s86, [#allocation3]
    $region29: #{tpu_custom_call.1} parent=1 // pred_fallthru
      _
    // Predicated region
    $region30: #{tpu_custom_call.1} parent=1 // pred_check
      _
    $region31: #{tpu_custom_call.1} parent=1 // pred_check_branch
      %90 = sbr.rel (0) target = $region33
    $region32: #{tpu_custom_call.1} parent=1 // pred_region
      %92 = dma.done [#allocation3], 16
    $region33: #{tpu_custom_call.1} parent=1 // pred_fallthru
      _
    %93 = vsyncpa [#allocation3], 1

</llo_original>
